<compile_context>
chip_gen: v7x
topology: tpu7x:2x2x1
jax: 0.10.0
libtpu: 0.0.40
codegen_flags: <defaults>
</compile_context>

<pallas_src>
import functools

import jax
import jax.numpy as jnp
from jax.experimental import pallas as pl
from jax.experimental.pallas import tpu as pltpu


def _attn_decoder_kernel(q_ref, enc_ref, out_ref, *, approx_recip):
    """One grid step processes a block of BB batch elements.

    q_ref:   (C, D)        shared query matrix (same block every step)
    enc_ref: (BB, T, D)    encoder outputs for BB batch elements
    out_ref: (BB, C, D)    context output block
    """
    bb, t, d = enc_ref.shape
    c = q_ref.shape[0]

    e = enc_ref[...]                                   # (BB, T, D), input dtype
    q = jnp.broadcast_to(q_ref[...], (bb, c, d))       # (BB, C, D), tiny

    # Scores directly in (BB, C, T) layout: one batched MXU matmul with f32
    # accumulation; the softmax reductions below are whole lane-axis reductions
    # (no unaligned lane slicing, no per-b unroll).
    scores = jnp.einsum("bcd,btd->bct", q, e,
                        preferred_element_type=jnp.float32)       # (BB, C, T)

    # Numerically stable softmax statistics, kept in f32.
    m = jnp.max(scores, axis=-1, keepdims=True)                   # (BB, C, 1)
    p = jnp.exp(scores - m)                                       # (BB, C, T)
    denom = jnp.sum(p, axis=-1, keepdims=True)                    # (BB, C, 1)

    # Unnormalized context: batched (C, T) @ (T, D), f32 accumulation.
    ctx = jnp.einsum("bct,btd->bcd", p.astype(e.dtype), e,
                     preferred_element_type=jnp.float32)          # (BB, C, D)

    # Normalize AFTER the matmul: C*D multiplies against an EUP reciprocal
    # instead of dividing the full (C, T) probability tensor.
    inv = pl.reciprocal(denom, approx=approx_recip)               # (BB, C, 1)
    out_ref[...] = (ctx * inv).astype(out_ref.dtype)
    # TODO(synk): for D < 128 the store is lane-sparse (masked vst + padded
    # writeback DMA); folding (C, D) -> (C*D,) lanes needs a sublane->lane
    # relayout that Mosaic reshape does not cleanly support at these shapes.
    # For production D that is a multiple of 128 the store is already lane-dense.


def attention_decoder(encoder_outputs, queries, *, block_b=None, input_dtype=None,
                      approx_recip=True, vmem_limit_bytes=32 * 1024 * 1024):
    """encoder_outputs: (B, T, D), queries: (C, D) -> context (B, C, D).

    input_dtype=jnp.bfloat16 selects the bf16-at-the-boundary fast path: the
    HBM-bandwidth-bound encoder stream is DMA'd at half width and both matmuls
    run on the bf16 MXU path; softmax stats / accumulation remain f32.
    """
    B, T, D = encoder_outputs.shape
    C, Dq = queries.shape
    assert D == Dq

    if input_dtype is not None:
        encoder_outputs = encoder_outputs.astype(input_dtype)
        queries = queries.astype(input_dtype)
    else:
        queries = queries.astype(encoder_outputs.dtype)
    out_dtype = encoder_outputs.dtype
    itemsize = jnp.dtype(encoder_outputs.dtype).itemsize

    # ---- VMEM budget (double-buffering-aware) ------------------------------
    # Per batch element of a grid step we pay, in VMEM:
    #   2x (double-buffered) encoder input block, 2x output block,
    #   f32 temporaries (scores + probs + context), plus the resident queries.
    per_b_bytes = (2 * T * D * itemsize        # encoder block, double-buffered
                   + 2 * C * D * itemsize      # output block, double-buffered
                   + 2 * C * T * 4             # f32 scores + exp(probs)
                   + 2 * C * D * 4)            # f32 context + normalized copy
    fixed_bytes = 2 * C * D * itemsize + C * D * 4    # queries (+ in-kernel broadcast)
    budget = vmem_limit_bytes // 2             # headroom under the scoped limit
    if block_b is None:
        block_b = max(1, min(B, (budget - fixed_bytes) // max(per_b_bytes, 1)))
    if B >= 2:
        # Keep >= 2 grid steps so both v7x TensorCores get "parallel" work.
        block_b = min(block_b, B // 2)
    block_b = max(1, min(block_b, B))
    # NOTE: for prime/awkward B this degrades toward block_b=1 (perf cliff, not a
    # correctness issue); pad B or allow a ragged tail block if that matters.
    while B % block_b:
        block_b -= 1
    num_blocks = B // block_b

    # TODO(synk): for production T where the (block_b, T, D) slab exceeds the VMEM
    # budget (esp. v7x's 64 MiB), tile T as a trailing "arbitrary" grid axis with an
    # online-softmax (flash-style) accumulator.

    kernel = functools.partial(_attn_decoder_kernel, approx_recip=approx_recip)

    return pl.pallas_call(
        kernel,
        out_shape=jax.ShapeDtypeStruct((B, C, D), out_dtype),
        grid_spec=pltpu.PrefetchScalarGridSpec(
            num_scalar_prefetch=0,
            grid=(num_blocks,),
            in_specs=[
                pl.BlockSpec((C, D), lambda b: (0, 0)),              # queries (resident)
                pl.BlockSpec((block_b, T, D), lambda b: (b, 0, 0)),  # encoder block
            ],
            out_specs=pl.BlockSpec((block_b, C, D), lambda b: (b, 0, 0)),
        ),
        compiler_params=pltpu.CompilerParams(
            dimension_semantics=("parallel",),
            vmem_limit_bytes=vmem_limit_bytes,
        ),
    )(queries, encoder_outputs)


def attention_decoder_ref(encoder_outputs, queries):
    # pure-JAX reference matching the PyTorch forward (true-f32 matmuls).
    scores = jnp.einsum("cd,btd->bct", queries, encoder_outputs, precision="highest")
    attn = jax.nn.softmax(scores, axis=-1)
    return jnp.einsum("bct,btd->bcd", attn, encoder_outputs, precision="highest")


if __name__ == "__main__":
    num_chars = 5
    hidden_dim = 32
    B, T, D = 2, 8, hidden_dim

    key = jax.random.PRNGKey(0)
    k_q, k_e = jax.random.split(key)

    # deterministic "parameter" init (analogue of torch.randn in __init__)
    queries = jax.random.normal(k_q, (num_chars, hidden_dim), dtype=jnp.float32)
    encoder_outputs = jax.random.normal(k_e, (B, T, D), dtype=jnp.float32)

    ref = attention_decoder_ref(encoder_outputs, queries)

    # f32 path, exact reciprocal: tight check against the f32 reference.
    out_exact = attention_decoder(encoder_outputs, queries, approx_recip=False)
    # f32 path, default EUP approximate reciprocal for the normalization.
    out_fast = attention_decoder(encoder_outputs, queries)
    # bf16-at-the-boundary fast path: half the HBM bytes on the encoder stream.
    out_bf16 = attention_decoder(encoder_outputs, queries, input_dtype=jnp.bfloat16)
    out_exact, out_fast, out_bf16 = jax.block_until_ready(
        (out_exact, out_fast, out_bf16))

    assert out_exact.shape == (B, num_chars, D)
    assert out_bf16.shape == (B, num_chars, D)
    assert jnp.allclose(out_exact, ref, atol=1e-4, rtol=1e-4)
    assert jnp.allclose(out_fast, ref, atol=1e-2, rtol=1e-2)
    assert jnp.allclose(out_bf16.astype(jnp.float32), ref, atol=5e-2, rtol=5e-2)
    print("KERNEL_OK")
</pallas_src>

<mosaic_0001>
module attributes {stable_mosaic.version = 11 : i64} {
  func.func @_attn_decoder_kernel(%arg0: i32, %arg1: memref<5x32xf32, #tpu.memory_space<vmem>>, %arg2: memref<1x8x32xf32, #tpu.memory_space<vmem>>, %arg3: memref<1x5x32xf32, #tpu.memory_space<vmem>>) attributes {dimension_semantics = [#tpu.dimension_semantics<parallel>], iteration_bounds = array<i64: 2>, scalar_prefetch = 0 : i64, scratch_operands = 0 : i64, tpu.core_type = #tpu.core_type<tc>, window_params = [{pipeline_mode = #tpu.pipeline_mode<synchronous>, transform_indices = @transform_0, window_bounds = array<i64: 5, 32>}, {transform_indices = @transform_1, window_bounds = array<i64: 1, 8, 32>}, {transform_indices = @transform_2, window_bounds = array<i64: 1, 5, 32>}]} {
    %c0 = arith.constant 0 : index
    %c0_0 = arith.constant 0 : index
    %c0_1 = arith.constant 0 : index
    %0 = vector.load %arg2[%c0, %c0_0, %c0_1] : memref<1x8x32xf32, #tpu.memory_space<vmem>>, vector<1x8x32xf32>
    %c0_2 = arith.constant 0 : index
    %c0_3 = arith.constant 0 : index
    %1 = vector.load %arg1[%c0_2, %c0_3] : memref<5x32xf32, #tpu.memory_space<vmem>>, vector<5x32xf32>
    %2 = vector.shape_cast %1 : vector<5x32xf32> to vector<1x5x32xf32>
    "tpu.trace_start"() <{level = 10 : i32, message = "bcd,btd->bct"}> : () -> ()
    %cst = arith.constant dense<0.000000e+00> : vector<1x5x8xf32>
    %3 = tpu.matmul %2, %0, %cst {dimension_numbers = #tpu.dot_dimension_numbers<[2], [2], [1], [1], [0, 0, 0, 1, 1, 1], [0], [0]>} : vector<1x5x32xf32>, vector<1x8x32xf32>, vector<1x5x8xf32> -> vector<1x5x8xf32>
    "tpu.trace_stop"() : () -> ()
    %cst_4 = arith.constant dense<0xFF800000> : vector<1x5xf32>
    %4 = vector.multi_reduction <maximumf>, %3, %cst_4 [2] : vector<1x5x8xf32> to vector<1x5xf32>
    %5 = vector.shape_cast %4 : vector<1x5xf32> to vector<1x5x1xf32>
    %6 = vector.broadcast %5 : vector<1x5x1xf32> to vector<1x5x8xf32>
    %7 = arith.subf %3, %6 : vector<1x5x8xf32>
    %8 = math.exp %7 : vector<1x5x8xf32>
    %cst_5 = arith.constant dense<0.000000e+00> : vector<1x5xf32>
    %9 = vector.multi_reduction <add>, %8, %cst_5 [2] : vector<1x5x8xf32> to vector<1x5xf32>
    %10 = vector.shape_cast %9 : vector<1x5xf32> to vector<1x5x1xf32>
    "tpu.trace_start"() <{level = 10 : i32, message = "bct,btd->bcd"}> : () -> ()
    %cst_6 = arith.constant dense<0.000000e+00> : vector<1x5x32xf32>
    %11 = tpu.matmul %8, %0, %cst_6 {dimension_numbers = #tpu.dot_dimension_numbers<[2], [1], [1], [2], [0, 0, 0, 1, 1, 2], [0], [0]>} : vector<1x5x8xf32>, vector<1x8x32xf32>, vector<1x5x32xf32> -> vector<1x5x32xf32>
    "tpu.trace_stop"() : () -> ()
    %12 = tpu.reciprocal %10 : vector<1x5x1xf32> -> vector<1x5x1xf32>
    %13 = vector.broadcast %12 : vector<1x5x1xf32> to vector<1x5x32xf32>
    %14 = arith.mulf %11, %13 : vector<1x5x32xf32>
    %c0_7 = arith.constant 0 : index
    %c0_8 = arith.constant 0 : index
    %c0_9 = arith.constant 0 : index
    %15 = vector.load %arg3[%c0_7, %c0_8, %c0_9] : memref<1x5x32xf32, #tpu.memory_space<vmem>>, vector<1x5x32xf32>
    tpu.vector_store %arg3[%c0_7, %c0_8, %c0_9], %14 {strides = array<i32>} : memref<1x5x32xf32, #tpu.memory_space<vmem>>, vector<1x5x32xf32>,
    return
  }
  func.func @transform_0(%arg0: i32) -> (i32, i32) {
    %c0_i32 = arith.constant 0 : i32
    %c0_i32_0 = arith.constant 0 : i32
    %c0_i32_1 = arith.constant 0 : i32
    return %c0_i32, %c0_i32_0 : i32, i32
  }
  func.func @transform_1(%arg0: i32) -> (i32, i32, i32) {
    %c0_i32 = arith.constant 0 : i32
    %c0_i32_0 = arith.constant 0 : i32
    %c0_i32_1 = arith.constant 0 : i32
    return %arg0, %c0_i32, %c0_i32_0 : i32, i32, i32
  }
  func.func @transform_2(%arg0: i32) -> (i32, i32, i32) {
    %c0_i32 = arith.constant 0 : i32
    %c0_i32_0 = arith.constant 0 : i32
    %c0_i32_1 = arith.constant 0 : i32
    return %arg0, %c0_i32, %c0_i32_0 : i32, i32, i32
  }
}

</mosaic_0001>

<llo_original>
// kernel: tpu_custom_call.1
$region0: #{tpu_custom_call.1}
  #allocation0 [shape = 'u32[]', space=smem, size = 0x4, offset = 0x4, fixed_abs, tag = 'smem constant byte address 0x4 - core index']
  #allocation1 [shape = 'u32[144,128]{1,0:T(1,128)}', space=vmem, size = 0x12000, scoped, tag = 'internal scratch']
  %s0 = inlined_call_operand.hbm [shape: f32[5,32], index: 0, kind: input, shape index: {}]
  %s1 = inlined_call_operand.hbm [shape: f32[2,8,32], index: 1, kind: input, shape index: {}]
  %s2 = inlined_call_operand.vmem [shape: f32[2,5,32], index: 2, kind: output, shape index: {}]
  %s3 = sld [smem:[#allocation0]]
  $region49: #{tpu_custom_call.1} parent=0
    _
  %s5 = ssub.s32 1, %s3
  %s6 = scalar_select 0, %s5, %s3
  $region1: #{tpu_custom_call.1} parent=0
    #allocation2 [shape = 'u8[4096]{0}', space=vmem, size = 0x1000, scoped, tag = 'input window, operand 0, single buffered']
    #allocation3 [shape = 's32[2]{0}', space=sflag, size = 0x8, scoped, tag = 'scoped memory for tpu_custom_call.1']
    #allocation4 [shape = 'u8[8192]{0}', space=vmem, size = 0x2000, scoped, tag = 'input window, operand 1']
    #allocation5 [shape = 's32[2]{0}', space=sflag, size = 0x8, scoped, tag = 'scoped memory for tpu_custom_call.1']
    %7 = vsyncpa [#allocation3], 0
    %8 = vsyncpa [#allocation5], 0
    %s9 = scalar_lea.sflag [#allocation5], 1
    %10 = vsyncpa %s9, 0
    loop: start=0, step=1, limit=4
    $region2: #{tpu_custom_call.1} parent=1 // loop_pre_header
      _
    $region3: #{tpu_custom_call.1} parent=1 // loop_header
      %s12 = sphi 0, %s16
      %p13 = scmp.ge.s32.totalorder %s12, 4
      %s20 = sphi 0, %s20
      %s22 = sphi 0, %s20
      %s23 = sphi 0, %s22
      %s37 = sphi 0, %s23
      %s43 = sphi 0, %s45
      %s46 = sphi 0, %s43
      %s47 = sphi 0, %s46
      %s63 = sphi 0, %s47
      %s69 = sphi 0, %s71
      %s72 = sphi 0, %s69
      %s73 = sphi 0, %s72
      %s89 = sphi 0, %s73
    $region4: #{tpu_custom_call.1} parent=1 // loop_header_branch
      %15 = sbr.rel (%p13) target = $region8
    $region5: #{tpu_custom_call.1} parent=1 // loop_body
      %s17 = ssub.s32 %s12, 1
      %s18 = ssub.s32 %s12, 2
      %s19 = sadd.s32 %s12, 1
      %s21 = sadd.s32 %s20, 1
      %p24 = scmp.eq.s32.totalorder %s12, 1
      %p25 = scmp.ne.s32.totalorder %s20, %s22
      %p26 = scmp.eq.s32.totalorder %s12, 0
      %p27 = por %p25, %p26
      %p28 = scmp.ne.s32.totalorder %s20, %s22
      %p29 = scmp.eq.s32.totalorder %s17, 1
      %p30 = por %p28, %p29
      %p31 = scmp.ne.s32.totalorder %s22, %s23
      %p32 = scmp.eq.s32.totalorder %s17, 0
      %p33 = por %p31, %p32
      %p34 = scmp.ne.s32.totalorder %s22, %s23
      %p35 = scmp.eq.s32.totalorder %s18, 1
      %p36 = por %p34, %p35
      %p38 = scmp.ne.s32.totalorder %s23, %s37
      %p39 = scmp.eq.s32.totalorder %s18, 0
      %p40 = por %p38, %p39
      %s41 = ssub.s32 %s12, %s19
      %p42 = scmp.eq.s32.totalorder %s41, 0
      %s44 = sadd.s32 %s43, 1
      %s45 = scalar_select %p42, %s43, %s44
      %p48 = pneg %p42
      %p49 = scmp.eq.s32.totalorder %s12, 1
      %p50 = por %p48, %p49
      %p51 = scmp.ne.s32.totalorder %s43, %s46
      %p52 = scmp.eq.s32.totalorder %s12, 0
      %p53 = por %p51, %p52
      %p54 = scmp.ne.s32.totalorder %s43, %s46
      %p55 = scmp.eq.s32.totalorder %s17, 1
      %p56 = por %p54, %p55
      %p57 = scmp.ne.s32.totalorder %s46, %s47
      %p58 = scmp.eq.s32.totalorder %s17, 0
      %p59 = por %p57, %p58
      %p60 = scmp.ne.s32.totalorder %s46, %s47
      %p61 = scmp.eq.s32.totalorder %s18, 1
      %p62 = por %p60, %p61
      %p64 = scmp.ne.s32.totalorder %s47, %s63
      %p65 = scmp.eq.s32.totalorder %s18, 0
      %p66 = por %p64, %p65
      %s67 = ssub.s32 %s12, %s19
      %p68 = scmp.eq.s32.totalorder %s67, 0
      %s70 = sadd.s32 %s69, 1
      %s71 = scalar_select %p68, %s69, %s70
      %p74 = pneg %p68
      %p75 = scmp.eq.s32.totalorder %s12, 1
      %p76 = por %p74, %p75
      %p77 = scmp.ne.s32.totalorder %s69, %s72
      %p78 = scmp.eq.s32.totalorder %s12, 0
      %p79 = por %p77, %p78
      %p80 = scmp.ne.s32.totalorder %s69, %s72
      %p81 = scmp.eq.s32.totalorder %s17, 1
      %p82 = por %p80, %p81
      %p83 = scmp.ne.s32.totalorder %s72, %s73
      %p84 = scmp.eq.s32.totalorder %s17, 0
      %p85 = por %p83, %p84
      %p86 = scmp.ne.s32.totalorder %s72, %s73
      %p87 = scmp.eq.s32.totalorder %s18, 1
      %p88 = por %p86, %p87
      %p90 = scmp.ne.s32.totalorder %s73, %s89
      %p91 = scmp.eq.s32.totalorder %s18, 0
      %p92 = por %p90, %p91
      %p93 = scmp.le.s32.totalorder 1, %s12
      %p94 = scmp.lt.s32.totalorder %s12, 3
      %p95 = pnand %p93, %p94
      %p96 = pneg %p95
      // Predicated region
      $region9: #{tpu_custom_call.1} parent=5 // pred_check
        _
      $region10: #{tpu_custom_call.1} parent=5 // pred_check_branch
        %98 = sbr.rel (%p95) target = $region12
      $region11: #{tpu_custom_call.1} parent=5 // pred_region
        %s99 = ssub.s32 %s12, 1
        // Predicated region
        $region13: #{tpu_custom_call.1} parent=11 // pred_check
          %p100 = pneg %p33
        $region14: #{tpu_custom_call.1} parent=11 // pred_check_branch
          %102 = sbr.rel (%p100) target = $region16
        $region15: #{tpu_custom_call.1} parent=11 // pred_region
          %s104 = ssub.s32 128, 128
          %105 = vsyncadd [#allocation3], %s104
          %s107 = sshll.u32 [#allocation2], 4
          %s108 = int_to_ptr.vmem [resolvable:$true] %s107
          %110 = dma.hbm_to_vmem [thread:$0]  %s0, 128, %s108, [#allocation3]
        $region16: #{tpu_custom_call.1} parent=11 // pred_fallthru
          _
      $region12: #{tpu_custom_call.1} parent=5 // pred_fallthru
        _
      %p111 = scmp.lt.s32.totalorder %s12, 2
      // Predicated region
      $region17: #{tpu_custom_call.1} parent=5 // pred_check
        %p112 = pneg %p111
      $region18: #{tpu_custom_call.1} parent=5 // pred_check_branch
        %114 = sbr.rel (%p112) target = $region20
      $region19: #{tpu_custom_call.1} parent=5 // pred_region
        // Predicated region
        $region21: #{tpu_custom_call.1} parent=19 // pred_check
          %p115 = pneg %p53
        $region22: #{tpu_custom_call.1} parent=19 // pred_check_branch
          %117 = sbr.rel (%p115) target = $region24
        $region23: #{tpu_custom_call.1} parent=19 // pred_region
          %s118 = sand.u32 %s43, 1
          %s119 = scalar_lea.sflag [#allocation5], %s118
          %s120 = sand.u32 %s43, 1
          %s121 = smul.addr %s120, 8
          %s122 = scalar_lea.vmem [#allocation4], %s121
          %s124 = ssub.s32 128, 128
          %125 = vsyncadd %s119, %s124
          %s126 = smul.addr %s12, 128
          %s127 = scalar_lea.hbm %s1, %s126
          %s129 = sshll.u32 %s122, 4
          %s130 = int_to_ptr.vmem [resolvable:$true] %s129
          %132 = dma.hbm_to_vmem [thread:$0]  %s127, 128, %s130, %s119
        $region24: #{tpu_custom_call.1} parent=19 // pred_fallthru
          _
      $region20: #{tpu_custom_call.1} parent=5 // pred_fallthru
        _
      %p133 = scmp.le.s32.totalorder 1, %s12
      %p134 = scmp.lt.s32.totalorder %s12, 3
      %p135 = pnand %p133, %p134
      %p136 = pneg %p135
      // Predicated region
      $region25: #{tpu_custom_call.1} parent=5 // pred_check
        _
      $region26: #{tpu_custom_call.1} parent=5 // pred_check_branch
        %138 = sbr.rel (%p135) target = $region28
      $region27: #{tpu_custom_call.1} parent=5 // pred_region
        %s139 = ssub.s32 %s12, 1
        // Predicated region
        $region29: #{tpu_custom_call.1} parent=27 // pred_check
          %p140 = pneg %p33
        $region30: #{tpu_custom_call.1} parent=27 // pred_check_branch
          %142 = sbr.rel (%p140) target = $region32
        $region31: #{tpu_custom_call.1} parent=27 // pred_region
          %143 = dma.done [#allocation3], 128
        $region32: #{tpu_custom_call.1} parent=27 // pred_fallthru
          _
        %s144 = sand.u32 %s46, 1
        %s145 = scalar_lea.sflag [#allocation5], %s144
        %s146 = sand.u32 %s46, 1
        %s147 = smul.addr %s146, 8
        %s148 = scalar_lea.vmem [#allocation4], %s147
        // Predicated region
        $region33: #{tpu_custom_call.1} parent=27 // pred_check
          %p149 = pneg %p59
        $region34: #{tpu_custom_call.1} parent=27 // pred_check_branch
          %151 = sbr.rel (%p149) target = $region36
        $region35: #{tpu_custom_call.1} parent=27 // pred_region
          %152 = dma.done %s145, 128
        $region36: #{tpu_custom_call.1} parent=27 // pred_fallthru
          _
        %p153 = pneg %p33
        %p154 = pneg %p30
        %s155 = sand.u32 %s46, 1
        %s156 = scalar_lea.sflag [#allocation5], %s155
        %s157 = sand.u32 %s46, 1
        %s158 = smul.addr %s157, 8
        %s159 = scalar_lea.vmem [#allocation4], %s158
        %p160 = pneg %p59
        %p161 = pneg %p56
        %p162 = pneg %p85
        %p163 = pneg %p82
        %p164 = scmp.lt.s32.totalorder %s17, 1
        %s165 = scalar_select %p164, %s17, 1
        %s166 = smul.addr %s165, 8
        %s167 = scalar_lea.vmem %s2, %s166
        %p168 = scmp.lt.s32.totalorder %s17, 1
        %s169 = scalar_select %p168, %s17, 1
        %s170 = smul.addr %s169, 8
        %s171 = scalar_lea.vmem %s2, %s170
        %v172 = vld [vmem:[%s148] sm:$0xff]
        %v173 = vld [vmem:[#allocation2] sm:$0x1f]
        %vm174 = vcmask 261120
        %v176 = vsel %vm174, %v173, 0
        %v179 = vsel %vm174, %v172, 0
        %181 = vmatprep.subr.mxu0 0.0
        %182 = vmatpush1.xpose.msra.mxu0 %v179
        %183 = vmatprep.subr.mxu0 0.0
        %184 = vmatpush1.xpose.msra.mxu0 0.0
        %185 = vmatprep.subr.mxu0 0.0
        %186 = vmatpush1.xpose.msra.mxu0 0.0
        %187 = vmatprep.subr.mxu0 0.0
        %188 = vmatpush1.xpose.msra.mxu0 0.0
        %189 = vmatprep.subr.mxu0 0.0
        %190 = vmatpush1.xpose.msra.mxu0 0.0
        %191 = vmatprep.subr.mxu0 0.0
        %192 = vmatpush1.xpose.msra.mxu0 0.0
        %193 = vmatprep.subr.mxu0 0.0
        %194 = vmatpush1.xpose.msra.mxu0 0.0
        %195 = vmatprep.subr.mxu0 0.0
        %196 = vmatpush1.xpose.msra.mxu0 0.0
        %197 = vmatprep.subr.mxu0 0.0
        %198 = vmatpush1.xpose.msra.mxu0 0.0
        %199 = vmatprep.subr.mxu0 0.0
        %200 = vmatpush1.xpose.msra.mxu0 0.0
        %201 = vmatprep.subr.mxu0 0.0
        %202 = vmatpush1.xpose.msra.mxu0 0.0
        %203 = vmatprep.subr.mxu0 0.0
        %204 = vmatpush1.xpose.msra.mxu0 0.0
        %205 = vmatprep.subr.mxu0 0.0
        %206 = vmatpush1.xpose.msra.mxu0 0.0
        %207 = vmatprep.subr.mxu0 0.0
        %208 = vmatpush1.xpose.msra.mxu0 0.0
        %209 = vmatprep.subr.mxu0 0.0
        %210 = vmatpush1.xpose.msra.mxu0 0.0
        %211 = vmatprep.subr.mxu0 0.0
        %212 = vmatpush1.xpose.msra.mxu0 0.0
        %213 = vmatprep.subr.mxu0 0.0
        %214 = vmatpush1.xpose.msra.mxu0 0.0
        %215 = vmatprep.subr.mxu0 0.0
        %216 = vmatpush1.xpose.msra.mxu0 0.0
        %217 = vmatprep.subr.mxu0 0.0
        %218 = vmatpush1.xpose.msra.mxu0 0.0
        %219 = vmatprep.subr.mxu0 0.0
        %220 = vmatpush1.xpose.msra.mxu0 0.0
        %221 = vmatprep.subr.mxu0 0.0
        %222 = vmatpush1.xpose.msra.mxu0 0.0
        %223 = vmatprep.subr.mxu0 0.0
        %224 = vmatpush1.xpose.msra.mxu0 0.0
        %225 = vmatprep.subr.mxu0 0.0
        %226 = vmatpush1.xpose.msra.mxu0 0.0
        %227 = vmatprep.subr.mxu0 0.0
        %228 = vmatpush1.xpose.msra.mxu0 0.0
        %229 = vmatprep.subr.mxu0 0.0
        %230 = vmatpush1.xpose.msra.mxu0 0.0
        %231 = vmatprep.subr.mxu0 0.0
        %232 = vmatpush1.xpose.msra.mxu0 0.0
        %233 = vmatprep.subr.mxu0 0.0
        %234 = vmatpush1.xpose.msra.mxu0 0.0
        %235 = vmatprep.subr.mxu0 0.0
        %236 = vmatpush1.xpose.msra.mxu0 0.0
        %237 = vmatprep.subr.mxu0 0.0
        %238 = vmatpush1.xpose.msra.mxu0 0.0
        %239 = vmatprep.subr.mxu0 0.0
        %240 = vmatpush1.xpose.msra.mxu0 0.0
        %241 = vmatprep.subr.mxu0 0.0
        %242 = vmatpush1.xpose.msra.mxu0 0.0
        %243 = vmatprep.subr.mxu0 0.0
        %244 = vmatpush1.xpose.msra.mxu0 0.0
        %245 = vmatprep.mubr.f32.mxu0 0.0
        %246 = vmatmul.mubr.f32.gmra.mrb[0].mxu0 %v176
        %v247 = vpop.f32.mrb[0].mxu0
        %v248 = vadd.f32 0.0, %v247
        %v249 = vpop.f32.mrb[0].mxu0
        %250 = vdwg.mxu0
        %vm251 = vcmask 61440
        %v252 = vsel %vm251, %v248, -inf
        %253 = vmax.xlane.f32.xlu0 %v252
        %v254 = vpop.xlane.xlu0 %253
        %v255 = vsub.f32 %v248, %v254
        %v256 = vmul.f32 %v255, 1.442695
        %v257 = vpow.pop %v256
        %v258 = vsel %vm251, %v257, 0.0
        %259 = vadd.xlane.f32.xlu0 %v258
        %v260 = vpop.xlane.xlu0 %259
        %vm261 = vcmask 64512
        %v263 = vsel %vm261, %v257, 0
        %265 = vmatprep.subr.mxu0 0.0
        %266 = vmatpush1.msra.mxu0 %v172
        %267 = vmatprep.subr.mxu0 0.0
        %268 = vmatpush1.msra.mxu0 0.0
        %269 = vmatprep.subr.mxu0 0.0
        %270 = vmatpush1.msra.mxu0 0.0
        %271 = vmatprep.subr.mxu0 0.0
        %272 = vmatpush1.msra.mxu0 0.0
        %273 = vmatprep.subr.mxu0 0.0
        %274 = vmatpush1.msra.mxu0 0.0
        %275 = vmatprep.subr.mxu0 0.0
        %276 = vmatpush1.msra.mxu0 0.0
        %277 = vmatprep.subr.mxu0 0.0
        %278 = vmatpush1.msra.mxu0 0.0
        %279 = vmatprep.subr.mxu0 0.0
        %280 = vmatpush1.msra.mxu0 0.0
        %281 = vmatprep.subr.mxu0 0.0
        %282 = vmatpush1.msra.mxu0 0.0
        %283 = vmatprep.subr.mxu0 0.0
        %284 = vmatpush1.msra.mxu0 0.0
        %285 = vmatprep.subr.mxu0 0.0
        %286 = vmatpush1.msra.mxu0 0.0
        %287 = vmatprep.subr.mxu0 0.0
        %288 = vmatpush1.msra.mxu0 0.0
        %289 = vmatprep.subr.mxu0 0.0
        %290 = vmatpush1.msra.mxu0 0.0
        %291 = vmatprep.subr.mxu0 0.0
        %292 = vmatpush1.msra.mxu0 0.0
        %293 = vmatprep.subr.mxu0 0.0
        %294 = vmatpush1.msra.mxu0 0.0
        %295 = vmatprep.subr.mxu0 0.0
        %296 = vmatpush1.msra.mxu0 0.0
        %297 = vmatprep.subr.mxu0 0.0
        %298 = vmatpush1.msra.mxu0 0.0
        %299 = vmatprep.subr.mxu0 0.0
        %300 = vmatpush1.msra.mxu0 0.0
        %301 = vmatprep.subr.mxu0 0.0
        %302 = vmatpush1.msra.mxu0 0.0
        %303 = vmatprep.subr.mxu0 0.0
        %304 = vmatpush1.msra.mxu0 0.0
        %305 = vmatprep.subr.mxu0 0.0
        %306 = vmatpush1.msra.mxu0 0.0
        %307 = vmatprep.subr.mxu0 0.0
        %308 = vmatpush1.msra.mxu0 0.0
        %309 = vmatprep.subr.mxu0 0.0
        %310 = vmatpush1.msra.mxu0 0.0
        %311 = vmatprep.subr.mxu0 0.0
        %312 = vmatpush1.msra.mxu0 0.0
        %313 = vmatprep.subr.mxu0 0.0
        %314 = vmatpush1.msra.mxu0 0.0
        %315 = vmatprep.subr.mxu0 0.0
        %316 = vmatpush1.msra.mxu0 0.0
        %317 = vmatprep.subr.mxu0 0.0
        %318 = vmatpush1.msra.mxu0 0.0
        %319 = vmatprep.subr.mxu0 0.0
        %320 = vmatpush1.msra.mxu0 0.0
        %321 = vmatprep.subr.mxu0 0.0
        %322 = vmatpush1.msra.mxu0 0.0
        %323 = vmatprep.subr.mxu0 0.0
        %324 = vmatpush1.msra.mxu0 0.0
        %325 = vmatprep.subr.mxu0 0.0
        %326 = vmatpush1.msra.mxu0 0.0
        %327 = vmatprep.subr.mxu0 0.0
        %328 = vmatpush1.msra.mxu0 0.0
        %329 = vmatprep.mubr.f32.mxu0 0.0
        %330 = vmatmul.mubr.f32.gmra.mrb[0].mxu0 %v263
        %v331 = vpop.f32.mrb[0].mxu0
        %v332 = vadd.f32 0.0, %v331
        %v333 = vpop.f32.mrb[0].mxu0
        %334 = vdwg.mxu0
        %v335 = vrcp.pop %v260
        %v336 = vmul.f32 %v332, %v335
        %vm337 = vcmask 258048
        %338 = vst.msk [vmem:[%s171] sm:$0x1f] %vm337, %v336
        %p339 = scmp.lt.s32.totalorder %s17, 1
        %s340 = scalar_select %p339, %s17, 1
        %s341 = smul.addr %s340, 8
        %s342 = scalar_lea.vmem %s2, %s341
        // Predicated region
        $region37: #{tpu_custom_call.1} parent=27 // pred_check
          %p343 = pneg %p82
        $region38: #{tpu_custom_call.1} parent=27 // pred_check_branch
          %345 = sbr.rel (%p343) target = $region40
        $region39: #{tpu_custom_call.1} parent=27 // pred_region
          _
        $region40: #{tpu_custom_call.1} parent=27 // pred_fallthru
          _
      $region28: #{tpu_custom_call.1} parent=5 // pred_fallthru
        _
      %p346 = scmp.le.s32.totalorder 2, %s12
      // Predicated region
      $region41: #{tpu_custom_call.1} parent=5 // pred_check
        %p347 = pneg %p346
      $region42: #{tpu_custom_call.1} parent=5 // pred_check_branch
        %349 = sbr.rel (%p347) target = $region44
      $region43: #{tpu_custom_call.1} parent=5 // pred_region
        %s350 = ssub.s32 %s12, 2
        // Predicated region
        $region45: #{tpu_custom_call.1} parent=43 // pred_check
          %p351 = pneg %p88
        $region46: #{tpu_custom_call.1} parent=43 // pred_check_branch
          %353 = sbr.rel (%p351) target = $region48
        $region47: #{tpu_custom_call.1} parent=43 // pred_region
          %p354 = scmp.lt.s32.totalorder %s18, 1
          %s355 = scalar_select %p354, %s18, 1
          %s356 = smul.addr %s355, 8
          %s357 = scalar_lea.vmem %s2, %s356
        $region48: #{tpu_custom_call.1} parent=43 // pred_fallthru
          _
      $region44: #{tpu_custom_call.1} parent=5 // pred_fallthru
        _
    $region6: #{tpu_custom_call.1} parent=1 // loop_footer
      %s16 = sadd.s32 1, %s12
    $region7: #{tpu_custom_call.1} parent=1 // loop_footer_branch
      %11 = sbr.rel target = $region3
    $region8: #{tpu_custom_call.1} parent=1 // loop_exit
      _
    %358 = vsyncpa [#allocation3], 1
    %s359 = scalar_lea.sflag [#allocation3], 1
    %360 = vsyncpa %s359, 1
    %361 = vsyncpa [#allocation5], 1
    %s362 = scalar_lea.sflag [#allocation5], 1
    %363 = vsyncpa %s362, 1

</llo_original>
